<compile_context>
chip_gen: v6e
topology: v6e:2x2x1
jax: 0.10.0
libtpu: 0.0.40
codegen_flags: <defaults>
</compile_context>

<pallas_src>
import functools

import jax
import jax.numpy as jnp
from jax.experimental import pallas as pl
from jax.experimental.pallas import tpu as pltpu

EPS = 1e-8  # torch.nn.CosineSimilarity default eps


def _bootstrap_loss_kernel(h1p_ref, h2p_ref, h1t_ref, h2t_ref, out_ref, acc_ref, *,
                           n_total, tile_n, tiles_per_group):
    g = pl.program_id(0)  # group (parallel axis -> TC shard on v7x)
    t = pl.program_id(1)  # tile within group (arbitrary / reduction axis)

    @pl.when(t == 0)
    def _init():  # fresh (1,1) accumulator for this group
        acc_ref[...] = jnp.zeros_like(acc_ref)

    def cos_rows(a_raw, b_raw):
        # Cosine similarity along dim=1, per row -> (tile_n, 1).  Upcast here
        # (not up front) so fewer f32 tile copies are live simultaneously.
        a = a_raw.astype(jnp.float32)
        b = b_raw.astype(jnp.float32)
        dot = jnp.sum(a * b, axis=1, keepdims=True)
        sa = jnp.sum(a * a, axis=1, keepdims=True)
        sb = jnp.sum(b * b, axis=1, keepdims=True)
        # torch.nn.CosineSimilarity: dot / (max(|a|,eps) * max(|b|,eps))
        #   == dot * rsqrt(max(|a|^2,eps^2) * max(|b|^2,eps^2))  -> one EUP rsqrt.
        eps_sq = jnp.float32(EPS * EPS)
        denom_sq = jnp.maximum(sa, eps_sq) * jnp.maximum(sb, eps_sq)
        return dot * jax.lax.rsqrt(denom_sq)

    # (2 - 2*cos1) + (2 - 2*cos2), per row.
    per_row = 4.0 - 2.0 * (cos_rows(h1p_ref[...], h2t_ref[...]) +
                           cos_rows(h2p_ref[...], h1t_ref[...]))

    # Mask rows past the true N (ragged last tile, and overshoot tiles when the
    # tile count does not divide evenly between groups).  Keep this a select
    # (jnp.where), NOT a multiply-by-mask: garbage rows may contain NaN/Inf.
    base = (g * tiles_per_group + t) * tile_n
    row = base + jax.lax.broadcasted_iota(jnp.int32, per_row.shape, 0)
    tile_sum = jnp.sum(jnp.where(row < n_total, per_row, 0.0), keepdims=True)  # (1,1)

    acc_ref[...] += tile_sum

    # Write this group's resident lane-dense (8,128) output block exactly once.
    @pl.when(t == tiles_per_group - 1)
    def _finish():
        out_ref[...] = jnp.broadcast_to(acc_ref[...], out_ref.shape)


def _round_up(x, m):
    return (x + m - 1) // m * m


def _tpu_vmem_bytes():
    """Physical VMEM per core; conservative 64 MiB (v7x) fallback."""
    vmem = 64 * 1024 * 1024
    try:
        info = pltpu.get_tpu_info()
        vmem = int(getattr(info, "vmem_capacity_bytes", vmem))
    except Exception:
        pass
    return max(vmem, 32 * 1024 * 1024)


def _num_tensorcores():
    """TensorCores per chip: 2 on v7x, 1 on v5e/v6e (conservative default 1)."""
    try:
        kind = jax.devices()[0].device_kind.lower()
    except Exception:
        return 1
    return 2 if "v7" in kind else 1


def bootstrap_loss(h1_pred, h2_pred, h1_target, h2_target, *,
                   max_tile_rows=None, n_splits=None):
    assert h1_pred.shape == h2_pred.shape == h1_target.shape == h2_target.shape
    assert h1_pred.dtype == h2_pred.dtype == h1_target.dtype == h2_target.dtype
    assert h1_pred.ndim == 2, "expected (N, D) inputs"
    n, d = h1_pred.shape

    itemsize = jnp.dtype(h1_pred.dtype).itemsize
    # Sublane granularity: 8 rows for 32-bit, 16 for 16-bit, 32 for 8-bit types.
    sub = {4: 8, 2: 16, 1: 32}.get(itemsize, 8)

    # ---- Chip-dependent VMEM budget and tile sizing (bytes, not rows). ----
    vmem_phys = _tpu_vmem_bytes()
    # Scoped VMEM limit: ~3/4 of physical, capped at 96 MiB.
    #   v5e/v6e (128 MiB) -> 96 MiB;  v7x (64 MiB) -> 48 MiB.
    vmem_limit = max(32 * 1024 * 1024, min(vmem_phys * 3 // 4, 96 * 1024 * 1024))
    # Per grid step we must fit:
    #   4 inputs x 2 pipeline buffers x tile_bytes          (8 * itemsize / elem-row)
    #   ~4 tile-sized f32 temporaries (upcasts + products)  (16 bytes / elem-row)
    margin = 8 * 1024 * 1024
    usable = max(vmem_limit - margin, 8 * 1024 * 1024)
    per_row_bytes = d * (8 * itemsize + 16)
    rows_by_budget = max(sub, (usable // per_row_bytes) // sub * sub)
    tile_n = min(rows_by_budget, _round_up(n, sub))
    if max_tile_rows is not None:  # testing hook: force multi-tile at small N
        tile_n = max(sub, min(tile_n, _round_up(max_tile_rows, sub)))

    num_tiles = pl.cdiv(n, tile_n)

    # ---- Group split across TensorCores: only where there are 2 TCs (v7x). ----
    if n_splits is None:
        cores = _num_tensorcores()
        n_splits = cores if (cores > 1 and num_tiles >= cores) else 1
    n_splits = max(1, int(n_splits))
    tiles_per_group = pl.cdiv(num_tiles, n_splits)
    grid = (n_splits, tiles_per_group)

    def in_index(g, t):
        # Clamp overshoot tiles to a valid block; their rows are masked in-kernel.
        return (jnp.minimum(g * tiles_per_group + t, num_tiles - 1), 0)

    in_spec = pl.BlockSpec((tile_n, d), in_index)
    out_spec = pl.BlockSpec((8, 128), lambda g, t: (g, 0))  # lane-dense partial sums

    kernel = functools.partial(
        _bootstrap_loss_kernel,
        n_total=n, tile_n=tile_n, tiles_per_group=tiles_per_group)

    # Advisory cost hint so XLA can overlap neighbors with this HBM stream.
    cost = pl.CostEstimate(
        flops=12 * n * d + 10 * n,        # 3 dots x 2 flops/elem x 2 cos pairs + epilogue
        transcendentals=2 * n,            # one rsqrt per cosine per row
        bytes_accessed=4 * n * d * itemsize + n_splits * 8 * 128 * 4)

    partials = pl.pallas_call(
        kernel,
        grid=grid,
        in_specs=[in_spec, in_spec, in_spec, in_spec],
        out_specs=out_spec,
        out_shape=jax.ShapeDtypeStruct((n_splits * 8, 128), jnp.float32),
        scratch_shapes=[pltpu.VMEM((1, 1), jnp.float32)],
        compiler_params=pltpu.CompilerParams(
            dimension_semantics=("parallel", "arbitrary"),
            vmem_limit_bytes=int(vmem_limit)),
        cost_estimate=cost,
    )(h1_pred, h2_pred, h1_target, h2_target)

    # Every element of group g's (8,128) block holds that group's partial sum.
    group_sums = partials[::8, 0]
    return jnp.sum(group_sums) * jnp.float32(1.0 / n)


def _reference(h1_pred, h2_pred, h1_target, h2_target):
    # Matches torch.nn.CosineSimilarity (per-norm eps clamp).
    def cos(a, b):
        dot = jnp.sum(a * b, axis=1)
        na = jnp.maximum(jnp.sqrt(jnp.sum(a * a, axis=1)), EPS)
        nb = jnp.maximum(jnp.sqrt(jnp.sum(b * b, axis=1)), EPS)
        return dot / (na * nb)

    loss = (2.0 - 2.0 * cos(h1_pred, h2_target)) + (2.0 - 2.0 * cos(h2_pred, h1_target))
    return jnp.mean(loss)


if __name__ == "__main__":
    key = jax.random.PRNGKey(0)

    def run_case(n, d, dtype, tol, **kw):
        ks = jax.random.split(jax.random.fold_in(key, n * 100003 + d), 4)
        args = [jax.random.normal(k, (n, d), dtype=jnp.float32).astype(dtype) for k in ks]
        got = bootstrap_loss(*args, **kw)
        jax.block_until_ready(got)
        ref = _reference(*[a.astype(jnp.float32) for a in args])
        assert jnp.allclose(got, ref, atol=tol, rtol=tol), (n, d, str(dtype), got, ref)

    # Tiny embeddings, single tile / single group (default chip-derived tiling).
    run_case(8, 32, jnp.float32, 1e-5)
    # Forced multi-tile + 2-way group split + ragged last tile + overshoot clamp.
    run_case(300, 128, jnp.float32, 1e-4, max_tile_rows=64, n_splits=2)
    # bf16 inputs kept bf16 in HBM, upcast inside the kernel.
    run_case(64, 128, jnp.bfloat16, 1e-4)

    print("KERNEL_OK")
</pallas_src>

<mosaic_0001>
module attributes {stable_mosaic.version = 11 : i64} {
  func.func @_bootstrap_loss_kernel(%arg0: i32, %arg1: i32, %arg2: memref<8x32xf32, #tpu.memory_space<vmem>>, %arg3: memref<8x32xf32, #tpu.memory_space<vmem>>, %arg4: memref<8x32xf32, #tpu.memory_space<vmem>>, %arg5: memref<8x32xf32, #tpu.memory_space<vmem>>, %arg6: memref<8x128xf32, #tpu.memory_space<vmem>>, %arg7: memref<1x1xf32, #tpu.memory_space<vmem>>) attributes {dimension_semantics = [#tpu.dimension_semantics<parallel>, #tpu.dimension_semantics<arbitrary>], iteration_bounds = array<i64: 1, 1>, scalar_prefetch = 0 : i64, scratch_operands = 1 : i64, tpu.core_type = #tpu.core_type<tc>, window_params = [{transform_indices = @transform_0, window_bounds = array<i64: 8, 32>}, {transform_indices = @transform_1, window_bounds = array<i64: 8, 32>}, {transform_indices = @transform_2, window_bounds = array<i64: 8, 32>}, {transform_indices = @transform_3, window_bounds = array<i64: 8, 32>}, {transform_indices = @transform_4, window_bounds = array<i64: 8, 128>}]} {
    %c0_i32 = arith.constant 0 : i32
    %0 = arith.cmpi eq, %arg1, %c0_i32 : i32
    %1 = arith.extui %0 : i1 to i32
    %c0_i32_0 = arith.constant 0 : i32
    %2 = arith.cmpi ne, %1, %c0_i32_0 : i32
    scf.if %2 {
      %cst_28 = arith.constant 0.000000e+00 : f32
      %65 = vector.broadcast %cst_28 : f32 to vector<1x1xf32>
      %c0_29 = arith.constant 0 : index
      %c0_30 = arith.constant 0 : index
      %66 = vector.load %arg7[%c0_29, %c0_30] : memref<1x1xf32, #tpu.memory_space<vmem>>, vector<1x1xf32>
      tpu.vector_store %arg7[%c0_29, %c0_30], %65 {strides = array<i32>} : memref<1x1xf32, #tpu.memory_space<vmem>>, vector<1x1xf32>,
    } else {
    }
    %c0 = arith.constant 0 : index
    %c0_1 = arith.constant 0 : index
    %3 = vector.load %arg2[%c0, %c0_1] : memref<8x32xf32, #tpu.memory_space<vmem>>, vector<8x32xf32>
    %c0_2 = arith.constant 0 : index
    %c0_3 = arith.constant 0 : index
    %4 = vector.load %arg5[%c0_2, %c0_3] : memref<8x32xf32, #tpu.memory_space<vmem>>, vector<8x32xf32>
    %5 = arith.mulf %3, %4 : vector<8x32xf32>
    %cst = arith.constant dense<0.000000e+00> : vector<8xf32>
    %6 = vector.multi_reduction <add>, %5, %cst [1] : vector<8x32xf32> to vector<8xf32>
    %7 = vector.shape_cast %6 : vector<8xf32> to vector<8x1xf32>
    %8 = arith.mulf %3, %3 : vector<8x32xf32>
    %cst_4 = arith.constant dense<0.000000e+00> : vector<8xf32>
    %9 = vector.multi_reduction <add>, %8, %cst_4 [1] : vector<8x32xf32> to vector<8xf32>
    %10 = vector.shape_cast %9 : vector<8xf32> to vector<8x1xf32>
    %11 = arith.mulf %4, %4 : vector<8x32xf32>
    %cst_5 = arith.constant dense<0.000000e+00> : vector<8xf32>
    %12 = vector.multi_reduction <add>, %11, %cst_5 [1] : vector<8x32xf32> to vector<8xf32>
    %13 = vector.shape_cast %12 : vector<8xf32> to vector<8x1xf32>
    %cst_6 = arith.constant 1.000000e-16 : f32
    %14 = vector.broadcast %cst_6 : f32 to vector<8x1xf32>
    %15 = arith.maximumf %10, %14 : vector<8x1xf32>
    %cst_7 = arith.constant 1.000000e-16 : f32
    %16 = vector.broadcast %cst_7 : f32 to vector<8x1xf32>
    %17 = arith.maximumf %13, %16 : vector<8x1xf32>
    %18 = arith.mulf %15, %17 : vector<8x1xf32>
    %19 = math.rsqrt %18 : vector<8x1xf32>
    %20 = arith.mulf %7, %19 : vector<8x1xf32>
    %c0_8 = arith.constant 0 : index
    %c0_9 = arith.constant 0 : index
    %21 = vector.load %arg3[%c0_8, %c0_9] : memref<8x32xf32, #tpu.memory_space<vmem>>, vector<8x32xf32>
    %c0_10 = arith.constant 0 : index
    %c0_11 = arith.constant 0 : index
    %22 = vector.load %arg4[%c0_10, %c0_11] : memref<8x32xf32, #tpu.memory_space<vmem>>, vector<8x32xf32>
    %23 = arith.mulf %21, %22 : vector<8x32xf32>
    %cst_12 = arith.constant dense<0.000000e+00> : vector<8xf32>
    %24 = vector.multi_reduction <add>, %23, %cst_12 [1] : vector<8x32xf32> to vector<8xf32>
    %25 = vector.shape_cast %24 : vector<8xf32> to vector<8x1xf32>
    %26 = arith.mulf %21, %21 : vector<8x32xf32>
    %cst_13 = arith.constant dense<0.000000e+00> : vector<8xf32>
    %27 = vector.multi_reduction <add>, %26, %cst_13 [1] : vector<8x32xf32> to vector<8xf32>
    %28 = vector.shape_cast %27 : vector<8xf32> to vector<8x1xf32>
    %29 = arith.mulf %22, %22 : vector<8x32xf32>
    %cst_14 = arith.constant dense<0.000000e+00> : vector<8xf32>
    %30 = vector.multi_reduction <add>, %29, %cst_14 [1] : vector<8x32xf32> to vector<8xf32>
    %31 = vector.shape_cast %30 : vector<8xf32> to vector<8x1xf32>
    %cst_15 = arith.constant 1.000000e-16 : f32
    %32 = vector.broadcast %cst_15 : f32 to vector<8x1xf32>
    %33 = arith.maximumf %28, %32 : vector<8x1xf32>
    %cst_16 = arith.constant 1.000000e-16 : f32
    %34 = vector.broadcast %cst_16 : f32 to vector<8x1xf32>
    %35 = arith.maximumf %31, %34 : vector<8x1xf32>
    %36 = arith.mulf %33, %35 : vector<8x1xf32>
    %37 = math.rsqrt %36 : vector<8x1xf32>
    %38 = arith.mulf %25, %37 : vector<8x1xf32>
    %39 = arith.addf %20, %38 : vector<8x1xf32>
    %cst_17 = arith.constant 2.000000e+00 : f32
    %40 = vector.broadcast %cst_17 : f32 to vector<8x1xf32>
    %41 = arith.mulf %40, %39 : vector<8x1xf32>
    %cst_18 = arith.constant 4.000000e+00 : f32
    %42 = vector.broadcast %cst_18 : f32 to vector<8x1xf32>
    %43 = arith.subf %42, %41 : vector<8x1xf32>
    %c1_i32 = arith.constant 1 : i32
    %44 = arith.muli %arg0, %c1_i32 : i32
    %45 = arith.addi %44, %arg1 : i32
    %c8_i32 = arith.constant 8 : i32
    %46 = arith.muli %45, %c8_i32 : i32
    %47 = tpu.iota {dimensions = array<i32: 0>} : vector<8x1xi32>
    %48 = vector.broadcast %46 : i32 to vector<8x1xi32>
    %49 = arith.addi %48, %47 : vector<8x1xi32>
    %c8_i32_19 = arith.constant 8 : i32
    %50 = vector.broadcast %c8_i32_19 : i32 to vector<8x1xi32>
    %51 = arith.cmpi slt, %49, %50 : vector<8x1xi32>
    %cst_20 = arith.constant 0.000000e+00 : f32
    %52 = vector.broadcast %cst_20 : f32 to vector<8x1xf32>
    %53 = arith.select %51, %43, %52 : vector<8x1xi1>, vector<8x1xf32>
    %54 = vector.shape_cast %53 : vector<8x1xf32> to vector<1x8x1xf32>
    %cst_21 = arith.constant dense<0.000000e+00> : vector<1xf32>
    %55 = vector.multi_reduction <add>, %54, %cst_21 [1, 2] : vector<1x8x1xf32> to vector<1xf32>
    %56 = vector.shape_cast %55 : vector<1xf32> to vector<1x1x1xf32>
    %57 = vector.extract %56[0, 0, 0] : f32 from vector<1x1x1xf32>
    %58 = vector.broadcast %57 : f32 to vector<1x1xf32>
    %c0_22 = arith.constant 0 : index
    %c0_23 = arith.constant 0 : index
    %59 = vector.load %arg7[%c0_22, %c0_23] : memref<1x1xf32, #tpu.memory_space<vmem>>, vector<1x1xf32>
    %60 = arith.addf %59, %58 : vector<1x1xf32>
    %c0_24 = arith.constant 0 : index
    %c0_25 = arith.constant 0 : index
    %61 = vector.load %arg7[%c0_24, %c0_25] : memref<1x1xf32, #tpu.memory_space<vmem>>, vector<1x1xf32>
    tpu.vector_store %arg7[%c0_24, %c0_25], %60 {strides = array<i32>} : memref<1x1xf32, #tpu.memory_space<vmem>>, vector<1x1xf32>,
    %c0_i32_26 = arith.constant 0 : i32
    %62 = arith.cmpi eq, %arg1, %c0_i32_26 : i32
    %63 = arith.extui %62 : i1 to i32
    %c0_i32_27 = arith.constant 0 : i32
    %64 = arith.cmpi ne, %63, %c0_i32_27 : i32
    scf.if %64 {
      %c0_28 = arith.constant 0 : index
      %c0_29 = arith.constant 0 : index
      %65 = vector.load %arg7[%c0_28, %c0_29] : memref<1x1xf32, #tpu.memory_space<vmem>>, vector<1x1xf32>
      %66 = vector.shape_cast %65 : vector<1x1xf32> to vector<1x1xf32>
      %67 = vector.broadcast %66 : vector<1x1xf32> to vector<8x128xf32>
      %c0_30 = arith.constant 0 : index
      %c0_31 = arith.constant 0 : index
      %68 = vector.load %arg6[%c0_30, %c0_31] : memref<8x128xf32, #tpu.memory_space<vmem>>, vector<8x128xf32>
      tpu.vector_store %arg6[%c0_30, %c0_31], %67 {strides = array<i32>} : memref<8x128xf32, #tpu.memory_space<vmem>>, vector<8x128xf32>,
    } else {
    }
    return
  }
  func.func @transform_0(%arg0: i32, %arg1: i32) -> (i32, i32) {
    %c1_i32 = arith.constant 1 : i32
    %0 = arith.muli %arg0, %c1_i32 : i32
    %1 = arith.addi %0, %arg1 : i32
    %c0_i32 = arith.constant 0 : i32
    %2 = arith.minsi %1, %c0_i32 : i32
    %c0_i32_0 = arith.constant 0 : i32
    %c0_i32_1 = arith.constant 0 : i32
    return %2, %c0_i32_0 : i32, i32
  }
  func.func @transform_1(%arg0: i32, %arg1: i32) -> (i32, i32) {
    %c1_i32 = arith.constant 1 : i32
    %0 = arith.muli %arg0, %c1_i32 : i32
    %1 = arith.addi %0, %arg1 : i32
    %c0_i32 = arith.constant 0 : i32
    %2 = arith.minsi %1, %c0_i32 : i32
    %c0_i32_0 = arith.constant 0 : i32
    %c0_i32_1 = arith.constant 0 : i32
    return %2, %c0_i32_0 : i32, i32
  }
  func.func @transform_2(%arg0: i32, %arg1: i32) -> (i32, i32) {
    %c1_i32 = arith.constant 1 : i32
    %0 = arith.muli %arg0, %c1_i32 : i32
    %1 = arith.addi %0, %arg1 : i32
    %c0_i32 = arith.constant 0 : i32
    %2 = arith.minsi %1, %c0_i32 : i32
    %c0_i32_0 = arith.constant 0 : i32
    %c0_i32_1 = arith.constant 0 : i32
    return %2, %c0_i32_0 : i32, i32
  }
  func.func @transform_3(%arg0: i32, %arg1: i32) -> (i32, i32) {
    %c1_i32 = arith.constant 1 : i32
    %0 = arith.muli %arg0, %c1_i32 : i32
    %1 = arith.addi %0, %arg1 : i32
    %c0_i32 = arith.constant 0 : i32
    %2 = arith.minsi %1, %c0_i32 : i32
    %c0_i32_0 = arith.constant 0 : i32
    %c0_i32_1 = arith.constant 0 : i32
    return %2, %c0_i32_0 : i32, i32
  }
  func.func @transform_4(%arg0: i32, %arg1: i32) -> (i32, i32) {
    %c0_i32 = arith.constant 0 : i32
    %c0_i32_0 = arith.constant 0 : i32
    return %arg0, %c0_i32 : i32, i32
  }
}

</mosaic_0001>

<llo_original>
// kernel: tpu_custom_call.1
$region0: #{tpu_custom_call.1}
  #allocation0 [shape = 'u32[]', space=smem, size = 0x4, offset = 0x4, fixed_abs, tag = 'smem constant byte address 0x4 - core index']
  #allocation1 [shape = 'u32[144,128]{1,0:T(1,128)}', space=vmem, size = 0x12000, scoped, tag = 'internal scratch']
  #allocation2 [shape = 'f32[1,1]{1,0:T(1,128)}', space=vmem, size = 0x200, scoped, tag = 'scratch operand']
  %s0 = inlined_call_operand.hbm [shape: f32[8,32], index: 0, kind: input, shape index: {}]
  %s1 = inlined_call_operand.hbm [shape: f32[8,32], index: 1, kind: input, shape index: {}]
  %s2 = inlined_call_operand.hbm [shape: f32[8,32], index: 2, kind: input, shape index: {}]
  %s3 = inlined_call_operand.hbm [shape: f32[8,32], index: 3, kind: input, shape index: {}]
  %s4 = inlined_call_operand.hbm [shape: f32[8,128], index: 4, kind: output, shape index: {}]
  %s5 = sld [smem:[#allocation0]]
  $region50: #{tpu_custom_call.1} parent=0
    _
  %s7 = ssub.s32 1, %s5
  %s8 = scalar_select 0, %s7, %s5
  $region1: #{tpu_custom_call.1} parent=0
    #allocation3 [shape = 'u8[4096]{0}', space=vmem, size = 0x1000, scoped, tag = 'input window, operand 0, single buffered']
    #allocation4 [shape = 's32[1]{0}', space=sflag, size = 0x4, scoped, tag = 'scoped memory for tpu_custom_call.1']
    #allocation5 [shape = 's32[1]{0}', space=sflag, size = 0x4, scoped, tag = 'scoped memory for tpu_custom_call.1']
    #allocation6 [shape = 'u8[4096]{0}', space=vmem, size = 0x1000, scoped, tag = 'input window, operand 1, single buffered']
    #allocation7 [shape = 's32[1]{0}', space=sflag, size = 0x4, scoped, tag = 'scoped memory for tpu_custom_call.1']
    #allocation8 [shape = 'u8[4096]{0}', space=vmem, size = 0x1000, scoped, tag = 'input window, operand 2, single buffered']
    #allocation9 [shape = 'u8[4096]{0}', space=vmem, size = 0x1000, scoped, tag = 'input window, operand 3, single buffered']
    #allocation10 [shape = 's32[1]{0}', space=sflag, size = 0x4, scoped, tag = 'scoped memory for tpu_custom_call.1']
    #allocation11 [shape = 'u8[4096]{0}', space=vmem, size = 0x1000, scoped, tag = 'output window, operand 0, single buffered']
    %9 = vsyncpa [#allocation4], 0
    %10 = vsyncpa [#allocation7], 0
    %11 = vsyncpa [#allocation10], 0
    %12 = vsyncpa [#allocation5], 0
    // Predicated region
    $region2: #{tpu_custom_call.1} parent=1 // pred_check
      _
    $region3: #{tpu_custom_call.1} parent=1 // pred_check_branch
      %14 = sbr.rel (0) target = $region5
    $region4: #{tpu_custom_call.1} parent=1 // pred_region
      %s15 = sadd.s32 0, 0
      %p16 = scmp.lt.s32.totalorder %s15, 0
      %s17 = scalar_select %p16, %s15, 0
      %s19 = ssub.s32 128, 128
      %20 = vsyncadd [#allocation4], %s19
      %s21 = smul.addr %s17, 128
      %s22 = scalar_lea.hbm %s0, %s21
      %s24 = sshll.u32 [#allocation3], 4
      %s25 = int_to_ptr.vmem [resolvable:$true] %s24
      %27 = dma.hbm_to_vmem [thread:$0]  %s22, 128, %s25, [#allocation4]
    $region5: #{tpu_custom_call.1} parent=1 // pred_fallthru
      _
    // Predicated region
    $region6: #{tpu_custom_call.1} parent=1 // pred_check
      _
    $region7: #{tpu_custom_call.1} parent=1 // pred_check_branch
      %29 = sbr.rel (0) target = $region9
    $region8: #{tpu_custom_call.1} parent=1 // pred_region
      %s30 = sadd.s32 0, 0
      %p31 = scmp.lt.s32.totalorder %s30, 0
      %s32 = scalar_select %p31, %s30, 0
      %s34 = ssub.s32 128, 128
      %35 = vsyncadd [#allocation7], %s34
      %s36 = smul.addr %s32, 128
      %s37 = scalar_lea.hbm %s1, %s36
      %s39 = sshll.u32 [#allocation6], 4
      %s40 = int_to_ptr.vmem [resolvable:$true] %s39
      %42 = dma.hbm_to_vmem [thread:$0]  %s37, 128, %s40, [#allocation7]
    $region9: #{tpu_custom_call.1} parent=1 // pred_fallthru
      _
    // Predicated region
    $region10: #{tpu_custom_call.1} parent=1 // pred_check
      _
    $region11: #{tpu_custom_call.1} parent=1 // pred_check_branch
      %44 = sbr.rel (0) target = $region13
    $region12: #{tpu_custom_call.1} parent=1 // pred_region
      %s45 = sadd.s32 0, 0
      %p46 = scmp.lt.s32.totalorder %s45, 0
      %s47 = scalar_select %p46, %s45, 0
      %s49 = ssub.s32 128, 128
      %50 = vsyncadd [#allocation7], %s49
      %s51 = smul.addr %s47, 128
      %s52 = scalar_lea.hbm %s2, %s51
      %s54 = sshll.u32 [#allocation8], 4
      %s55 = int_to_ptr.vmem [resolvable:$true] %s54
      %57 = dma.hbm_to_vmem [thread:$0]  %s52, 128, %s55, [#allocation7]
    $region13: #{tpu_custom_call.1} parent=1 // pred_fallthru
      _
    // Predicated region
    $region14: #{tpu_custom_call.1} parent=1 // pred_check
      _
    $region15: #{tpu_custom_call.1} parent=1 // pred_check_branch
      %59 = sbr.rel (0) target = $region17
    $region16: #{tpu_custom_call.1} parent=1 // pred_region
      %s60 = sadd.s32 0, 0
      %p61 = scmp.lt.s32.totalorder %s60, 0
      %s62 = scalar_select %p61, %s60, 0
      %s64 = ssub.s32 128, 128
      %65 = vsyncadd [#allocation10], %s64
      %s66 = smul.addr %s62, 128
      %s67 = scalar_lea.hbm %s3, %s66
      %s69 = sshll.u32 [#allocation9], 4
      %s70 = int_to_ptr.vmem [resolvable:$true] %s69
      %72 = dma.hbm_to_vmem [thread:$0]  %s67, 128, %s70, [#allocation10]
    $region17: #{tpu_custom_call.1} parent=1 // pred_fallthru
      _
    // Predicated region
    $region18: #{tpu_custom_call.1} parent=1 // pred_check
      _
    $region19: #{tpu_custom_call.1} parent=1 // pred_check_branch
      %74 = sbr.rel (0) target = $region21
    $region20: #{tpu_custom_call.1} parent=1 // pred_region
      %75 = dma.done [#allocation4], 128
    $region21: #{tpu_custom_call.1} parent=1 // pred_fallthru
      _
    // Predicated region
    $region22: #{tpu_custom_call.1} parent=1 // pred_check
      _
    $region23: #{tpu_custom_call.1} parent=1 // pred_check_branch
      %77 = sbr.rel (0) target = $region25
    $region24: #{tpu_custom_call.1} parent=1 // pred_region
      %78 = dma.done [#allocation7], 128
    $region25: #{tpu_custom_call.1} parent=1 // pred_fallthru
      _
    // Predicated region
    $region26: #{tpu_custom_call.1} parent=1 // pred_check
      _
    $region27: #{tpu_custom_call.1} parent=1 // pred_check_branch
      %80 = sbr.rel (0) target = $region29
    $region28: #{tpu_custom_call.1} parent=1 // pred_region
      %81 = dma.done [#allocation7], 128
    $region29: #{tpu_custom_call.1} parent=1 // pred_fallthru
      _
    // Predicated region
    $region30: #{tpu_custom_call.1} parent=1 // pred_check
      _
    $region31: #{tpu_custom_call.1} parent=1 // pred_check_branch
      %83 = sbr.rel (0) target = $region33
    $region32: #{tpu_custom_call.1} parent=1 // pred_region
      %84 = dma.done [#allocation10], 128
    $region33: #{tpu_custom_call.1} parent=1 // pred_fallthru
      _
    %s85 = sadd.s32 0, 0
    %p86 = scmp.lt.s32.totalorder %s85, 0
    %s87 = scalar_select %p86, %s85, 0
    %s88 = sadd.s32 0, 0
    %p89 = scmp.lt.s32.totalorder %s88, 0
    %s90 = scalar_select %p89, %s88, 0
    %s91 = sadd.s32 0, 0
    %p92 = scmp.lt.s32.totalorder %s91, 0
    %s93 = scalar_select %p92, %s91, 0
    %s94 = sadd.s32 0, 0
    %p95 = scmp.lt.s32.totalorder %s94, 0
    %s96 = scalar_select %p95, %s94, 0
    %p97 = scmp.eq.s32.totalorder 0, 0
    // Predicated region
    $region34: #{tpu_custom_call.1} parent=1 // pred_check
      %p98 = pneg %p97
    $region35: #{tpu_custom_call.1} parent=1 // pred_check_branch
      %100 = sbr.rel (%p98) target = $region37
    $region36: #{tpu_custom_call.1} parent=1 // pred_region
      %vm101 = vcmask 0
      %102 = vst.msk [vmem:[#allocation2] sm:$0x1] %vm101, 0.0
    $region37: #{tpu_custom_call.1} parent=1 // pred_fallthru
      _
    %v103 = vld [vmem:[#allocation3] sm:$0xff]
    %v104 = vld [vmem:[#allocation9] sm:$0xff]
    %v105 = vmul.f32 %v103, %v104
    %vm106 = vcmask 261120
    %v107 = vsel %vm106, %v105, 0.0
    %108 = vadd.xlane.f32.xlu0 %v107
    %v109 = vpop.xlane.xlu0 %108
    %v110 = vmul.f32 %v103, %v103
    %v111 = vsel %vm106, %v110, 0.0
    %112 = vadd.xlane.f32.xlu0 %v111
    %v113 = vpop.xlane.xlu0 %112
    %v114 = vmul.f32 %v104, %v104
    %v115 = vsel %vm106, %v114, 0.0
    %116 = vadd.xlane.f32.xlu0 %v115
    %v117 = vpop.xlane.xlu0 %116
    %v118 = vmax.f32 %v113, 1e-16
    %v119 = vmax.f32 %v117, 1e-16
    %v120 = vmul.f32 %v118, %v119
    %v121 = vrsqrt.pop %v120
    %v122 = vmul.f32 %v109, %v121
    %v123 = vld [vmem:[#allocation6] sm:$0xff]
    %v124 = vld [vmem:[#allocation8] sm:$0xff]
    %v125 = vmul.f32 %v123, %v124
    %v126 = vsel %vm106, %v125, 0.0
    %127 = vadd.xlane.f32.xlu0 %v126
    %v128 = vpop.xlane.xlu0 %127
    %v129 = vmul.f32 %v123, %v123
    %v130 = vsel %vm106, %v129, 0.0
    %131 = vadd.xlane.f32.xlu0 %v130
    %v132 = vpop.xlane.xlu0 %131
    %v133 = vmul.f32 %v124, %v124
    %v134 = vsel %vm106, %v133, 0.0
    %135 = vadd.xlane.f32.xlu0 %v134
    %v136 = vpop.xlane.xlu0 %135
    %v137 = vmax.f32 %v132, 1e-16
    %v138 = vmax.f32 %v136, 1e-16
    %v139 = vmul.f32 %v137, %v138
    %v140 = vrsqrt.pop %v139
    %v141 = vmul.f32 %v128, %v140
    %v142 = vadd.f32 %v122, %v141
    %v143 = vmul.f32 %v142, 2.0
    %v144 = vsub.f32 4.0, %v143
    %s145 = sadd.s32 0, 0
    %s146 = smul.u32 %s145, 8
    %v147 = vlaneseq
    %v148 = vshrl.u32 %v147, 7
    %v149 = vstv %s146
    %v150 = vadd.s32 %v149, %v148
    %vm151 = vcmp.lt.s32.totalorder %v150, 8
    %v152 = vsel %vm151, %v144, 0.0
    %vm153 = vcmask 7168
    %v154 = vsel %vm153, %v152, 0.0
    %155 = vadd.xlane.f32.xlu0 %v154
    %v156 = vpop.xlane.xlu0 %155
    %v157 = vrot.slane %v156, 4
    %v158 = vadd.f32 %v156, %v157
    %v159 = vrot.slane %v158, 2
    %v160 = vadd.f32 %v158, %v159
    %v161 = vrot.slane %v160, 1
    %v162 = vadd.f32 %v160, %v161
    %s163 = vtos %v162
    %v164 = vstv %s163
    %v165 = vld [vmem:[#allocation2] sm:$0x1]
    %v166 = vadd.f32 %v165, %v164
    %vm167 = vcmask 0
    %168 = vst.msk [vmem:[#allocation2] sm:$0x1] %vm167, %v166
    // Predicated region
    $region38: #{tpu_custom_call.1} parent=1 // pred_check
      %p169 = pneg %p97
    $region39: #{tpu_custom_call.1} parent=1 // pred_check_branch
      %171 = sbr.rel (%p169) target = $region41
    $region40: #{tpu_custom_call.1} parent=1 // pred_region
      %v172 = vld [vmem:[#allocation2] sm:$0x1]
      %v174 = vlaneseq
      %v175 = vshrl.u32 %v174, 7
      %v176 = vsub.s32 0, %v175
      %v177 = vrot.slane %v172, %v176
      %178 = vset.pattern.permute.xlu0 0
      %179 = vperm.xlu0 %178, %v177
      %v180 = vpop.permute.xlu0 %179
      %182 = vst [vmem:[#allocation11] sm:$0xff] %v180
    $region41: #{tpu_custom_call.1} parent=1 // pred_fallthru
      _
    // Predicated region
    $region42: #{tpu_custom_call.1} parent=1 // pred_check
      _
    $region43: #{tpu_custom_call.1} parent=1 // pred_check_branch
      %184 = sbr.rel (0) target = $region45
    $region44: #{tpu_custom_call.1} parent=1 // pred_region
      %s186 = ssub.s32 128, 128
      %187 = vsyncadd [#allocation5], %s186
      %s189 = sshll.u32 [#allocation11], 4
      %s190 = int_to_ptr.vmem [resolvable:$true] %s189
      %192 = dma.vmem_to_hbm [thread:$0]  %s190, 128, %s4, [#allocation5]
    $region45: #{tpu_custom_call.1} parent=1 // pred_fallthru
      _
    // Predicated region
    $region46: #{tpu_custom_call.1} parent=1 // pred_check
      _
    $region47: #{tpu_custom_call.1} parent=1 // pred_check_branch
      %194 = sbr.rel (0) target = $region49
    $region48: #{tpu_custom_call.1} parent=1 // pred_region
      %195 = dma.done [#allocation5], 128
    $region49: #{tpu_custom_call.1} parent=1 // pred_fallthru
      _
    %196 = vsyncpa [#allocation4], 1
    %197 = vsyncpa [#allocation7], 1
    %198 = vsyncpa [#allocation10], 1
    %199 = vsyncpa [#allocation5], 1

</llo_original>
